<compile_context>
chip_gen: v5e
topology: v5e:2x2
jax: 0.10.0
libtpu: 0.0.40
codegen_flags: <defaults>
</compile_context>

<pallas_src>
import functools
import math

import jax
import jax.numpy as jnp
from jax.experimental import pallas as pl
from jax.experimental.pallas import tpu as pltpu


def _round_up(v, m):
    return (v + m - 1) // m * m


def _lcm(a, b):
    return a * b // math.gcd(a, b)


# --------------------------------------------------------------------------- #
# Kernel: one GraphConvolution layer, tiled over (node-row tiles, adj k-tiles)
#   out[i] = act( sum_k adj[i, k] @ (x[k] @ W + b) )
# --------------------------------------------------------------------------- #
def _gcn_layer_kernel(adj_ref, x_ref, w_ref, b_ref, out_ref, acc_ref, *, apply_relu):
    k = pl.program_id(1)

    @pl.when(k == 0)
    def _():
        acc_ref[...] = jnp.zeros_like(acc_ref)

    # Linear part for this contraction tile: bf16 MXU operands, f32 accumulate,
    # f32 bias-add epilogue on the VPU, re-cast to bf16 for the aggregation matmul.
    lin = jnp.dot(x_ref[...], w_ref[...], preferred_element_type=jnp.float32)
    lin = lin + b_ref[...]

    # Aggregation: accumulate adj_tile @ lin_tile into the f32 scratch accumulator.
    acc_ref[...] += jnp.dot(adj_ref[...], lin.astype(jnp.bfloat16),
                            preferred_element_type=jnp.float32)

    @pl.when(k == pl.num_programs(1) - 1)
    def _():
        r = acc_ref[...]
        if apply_relu:
            r = jnp.maximum(r, 0.0)
        out_ref[...] = r.astype(out_ref.dtype)


def _gcn_layer(adj_p, x_p, w_p, b_p, *, tm, tk, apply_relu):
    """One tiled GraphConvolution layer. All inputs are padded/lane-dense bf16/f32."""
    Np = adj_p.shape[0]
    Fi = x_p.shape[1]
    Fo = w_p.shape[1]
    assert adj_p.shape == (Np, Np) and x_p.shape == (Np, Fi)
    assert Np % tm == 0 and Np % tk == 0

    num_i, num_k = Np // tm, Np // tk

    # Roofline hints (bf16 inputs/outputs, f32 biases). The linear part and the x
    # stream are re-done once per output row tile (cheap relative to adj traffic).
    flops = 2 * Np * Fi * Fo * num_i + 2 * Np * Np * Fo
    bytes_accessed = (2 * Np * Np            # adj (bf16)
                      + 2 * Np * Fi * num_i  # x tiles, re-streamed per row tile
                      + 2 * Fi * Fo + 4 * Fo # weight + bias
                      + 2 * Np * Fo)         # output (bf16)

    kernel = functools.partial(_gcn_layer_kernel, apply_relu=apply_relu)

    return pl.pallas_call(
        kernel,
        out_shape=jax.ShapeDtypeStruct((Np, Fo), jnp.bfloat16),
        grid_spec=pltpu.PrefetchScalarGridSpec(
            num_scalar_prefetch=0,
            grid=(num_i, num_k),
            in_specs=[
                pl.BlockSpec((tm, tk), lambda i, k: (i, k)),   # adj tile
                pl.BlockSpec((tk, Fi), lambda i, k: (k, 0)),   # x rows for this k-tile
                pl.BlockSpec((Fi, Fo), lambda i, k: (0, 0)),   # weight (resident)
                pl.BlockSpec((1, Fo), lambda i, k: (0, 0)),    # bias (lane-dense row)
            ],
            out_specs=pl.BlockSpec((tm, Fo), lambda i, k: (i, 0)),
            scratch_shapes=[pltpu.VMEM((tm, Fo), jnp.float32)],
        ),
        compiler_params=pltpu.CompilerParams(
            dimension_semantics=("parallel", "arbitrary")),
        cost_estimate=pl.CostEstimate(flops=flops, transcendentals=0,
                                      bytes_accessed=bytes_accessed),
    )(adj_p, x_p, w_p, b_p)


# --------------------------------------------------------------------------- #
# One-time prepare step (hoisted out of the forward path) + per-call forward.
# --------------------------------------------------------------------------- #
def prepare_nc_model(adj, params, *, tm=256, tk=256):
    """Pad + cast the static operands ONCE. Only x is padded per forward call."""
    N = adj.shape[0]
    Fin, Fh = params["w1"].shape
    C = params["w2"].shape[1]
    assert adj.shape == (N, N)

    # Lane/MXU-dense padding: nodes to a multiple of the tile sizes (>=128 lanes,
    # 16-sublane aligned for bf16); feature dims to multiples of 128.
    Np = _round_up(N, _lcm(tm, tk))
    Fip = _round_up(Fin, 128)
    Fhp = _round_up(Fh, 128)
    Cp = _round_up(C, 128)

    def pad2(a, rows, cols):
        return jnp.pad(a, ((0, rows - a.shape[0]), (0, cols - a.shape[1])))

    return {
        "adj": pad2(adj, Np, Np).astype(jnp.bfloat16),
        "w1": pad2(params["w1"], Fip, Fhp).astype(jnp.bfloat16),
        "w2": pad2(params["w2"], Fhp, Cp).astype(jnp.bfloat16),
        "b1": jnp.pad(params["b1"], (0, Fhp - Fh)).reshape(1, Fhp).astype(jnp.float32),
        "b2": jnp.pad(params["b2"], (0, Cp - C)).reshape(1, Cp).astype(jnp.float32),
        "dims": (N, Fin, C, Np, Fip),
        "tiles": (tm, tk),
    }


def nc_model_forward(h, prepared):
    """NCModel.forward: encode (GCN, relu after aggregation) then decode (GCNDecoder)."""
    b = h.shape[0]
    assert b > 1  # mirrors the PyTorch forward's assert

    N, Fin, C, Np, Fip = prepared["dims"]
    tm, tk = prepared["tiles"]
    assert h.shape == (N, Fin)

    # Per-call work on the feature matrix only (adj/weights were prepared once).
    x_p = jnp.pad(h, ((0, Np - N), (0, Fip - Fin))).astype(jnp.bfloat16)

    # encode: h1 = relu(adj @ (x @ W1 + b1))
    h1 = _gcn_layer(prepared["adj"], x_p, prepared["w1"], prepared["b1"],
                    tm=tm, tk=tk, apply_relu=True)
    # decode: out = adj @ (h1 @ W2 + b2)
    out_p = _gcn_layer(prepared["adj"], h1, prepared["w2"], prepared["b2"],
                       tm=tm, tk=tk, apply_relu=False)

    # Slice the valid logits out of the padded bf16 output; tiny upcast for the caller.
    return out_p[:N, :C].astype(jnp.float32)


# --------------------------------------------------------------------------- #
# Deterministic synthetic inputs + references.
# --------------------------------------------------------------------------- #
def make_params(key, feat_dim, hidden_dim, n_classes):
    # Weights stored as (in, out) so the kernel's x @ W matches nn.Linear (x @ W_pt.T).
    k1, k2 = jax.random.split(key)

    def xavier(k, fan_in, fan_out):
        lim = jnp.sqrt(6.0 / (fan_in + fan_out))
        return jax.random.uniform(k, (fan_in, fan_out), jnp.float32, -lim, lim)

    return {
        "w1": xavier(k1, feat_dim, hidden_dim),
        "b1": jnp.zeros((hidden_dim,), jnp.float32),
        "w2": xavier(k2, hidden_dim, n_classes),
        "b2": jnp.zeros((n_classes,), jnp.float32),
    }


def make_normalized_adj(key, n_nodes):
    # Random symmetric adjacency with self-loops, D^-1/2 A D^-1/2 normalized.
    a = (jax.random.uniform(key, (n_nodes, n_nodes)) < 0.3).astype(jnp.float32)
    a = jnp.maximum(a, a.T)
    a = a + jnp.eye(n_nodes, dtype=jnp.float32)
    a = jnp.minimum(a, 1.0)
    deg = a.sum(axis=1)
    d_inv_sqrt = 1.0 / jnp.sqrt(deg)
    return a * d_inv_sqrt[:, None] * d_inv_sqrt[None, :]


def _reference_forward(h, adj, params, mxu_dtype):
    """Plain-JAX reference with the same matmul-operand-dtype policy as the kernel."""
    lin1 = jnp.dot(h.astype(mxu_dtype), params["w1"].astype(mxu_dtype),
                   preferred_element_type=jnp.float32) + params["b1"]
    h1 = jnp.maximum(
        jnp.dot(adj.astype(mxu_dtype), lin1.astype(mxu_dtype),
                preferred_element_type=jnp.float32), 0.0)
    lin2 = jnp.dot(h1.astype(mxu_dtype), params["w2"].astype(mxu_dtype),
                   preferred_element_type=jnp.float32) + params["b2"]
    return jnp.dot(adj.astype(mxu_dtype), lin2.astype(mxu_dtype),
                   preferred_element_type=jnp.float32)


if __name__ == "__main__":
    # Small shapes, but large enough (with 128-tiles) to exercise a real (3, 3) grid,
    # the k-loop accumulator, and the padding/slicing paths (300 -> 384 padded nodes).
    n_nodes, feat_dim, hidden_dim, n_classes = 300, 48, 40, 7
    tm = tk = 128

    root = jax.random.PRNGKey(0)
    k_x, k_adj, k_par = jax.random.split(root, 3)

    h = jax.random.normal(k_x, (n_nodes, feat_dim), jnp.float32)
    adj = make_normalized_adj(k_adj, n_nodes)
    params = make_params(k_par, feat_dim, hidden_dim, n_classes)

    prepared = prepare_nc_model(adj, params, tm=tm, tk=tk)   # one-time pad/cast
    out = nc_model_forward(h, prepared)
    out = jax.block_until_ready(out)
    assert out.shape == (n_nodes, n_classes)

    # Tight check vs a reference using the same bf16-operand / f32-accumulate policy
    # (small slack for tiled accumulation order + bf16 storage of h1 / logits).
    ref_bf16 = _reference_forward(h, adj, params, jnp.bfloat16)
    assert jnp.allclose(out, ref_bf16, atol=5e-2, rtol=5e-2), (
        float(jnp.max(jnp.abs(out - ref_bf16))))

    # Loose semantic check vs the pure-f32 PyTorch-equivalent forward.
    ref_f32 = _reference_forward(h, adj, params, jnp.float32)
    assert jnp.allclose(out, ref_f32, atol=0.25, rtol=0.25), (
        float(jnp.max(jnp.abs(out - ref_f32))))

    print("KERNEL_OK")
</pallas_src>

<mosaic_0001>
module attributes {stable_mosaic.version = 11 : i64} {
  func.func @_gcn_layer_kernel(%arg0: i32, %arg1: i32, %arg2: memref<128x128xbf16, #tpu.memory_space<vmem>>, %arg3: memref<128x128xbf16, #tpu.memory_space<vmem>>, %arg4: memref<128x128xbf16, #tpu.memory_space<vmem>>, %arg5: memref<1x128xf32, #tpu.memory_space<vmem>>, %arg6: memref<128x128xbf16, #tpu.memory_space<vmem>>, %arg7: memref<128x128xf32, #tpu.memory_space<vmem>>) attributes {dimension_semantics = [#tpu.dimension_semantics<parallel>, #tpu.dimension_semantics<arbitrary>], iteration_bounds = array<i64: 3, 3>, scalar_prefetch = 0 : i64, scratch_operands = 1 : i64, tpu.core_type = #tpu.core_type<tc>, window_params = [{transform_indices = @transform_0, window_bounds = array<i64: 128, 128>}, {transform_indices = @transform_1, window_bounds = array<i64: 128, 128>}, {pipeline_mode = #tpu.pipeline_mode<synchronous>, transform_indices = @transform_2, window_bounds = array<i64: 128, 128>}, {pipeline_mode = #tpu.pipeline_mode<synchronous>, transform_indices = @transform_3, window_bounds = array<i64: 1, 128>}, {transform_indices = @transform_4, window_bounds = array<i64: 128, 128>}]} {
    %c0_i32 = arith.constant 0 : i32
    %0 = arith.cmpi eq, %arg1, %c0_i32 : i32
    %1 = arith.extui %0 : i1 to i32
    %c0_i32_0 = arith.constant 0 : i32
    %2 = arith.cmpi ne, %1, %c0_i32_0 : i32
    scf.if %2 {
      %cst_14 = arith.constant 0.000000e+00 : f32
      %18 = vector.broadcast %cst_14 : f32 to vector<128x128xf32>
      %c0_15 = arith.constant 0 : index
      %c0_16 = arith.constant 0 : index
      %19 = vector.load %arg7[%c0_15, %c0_16] : memref<128x128xf32, #tpu.memory_space<vmem>>, vector<128x128xf32>
      tpu.vector_store %arg7[%c0_15, %c0_16], %18 {strides = array<i32>} : memref<128x128xf32, #tpu.memory_space<vmem>>, vector<128x128xf32>,
    } else {
    }
    %c0 = arith.constant 0 : index
    %c0_1 = arith.constant 0 : index
    %3 = vector.load %arg3[%c0, %c0_1] : memref<128x128xbf16, #tpu.memory_space<vmem>>, vector<128x128xbf16>
    %c0_2 = arith.constant 0 : index
    %c0_3 = arith.constant 0 : index
    %4 = vector.load %arg4[%c0_2, %c0_3] : memref<128x128xbf16, #tpu.memory_space<vmem>>, vector<128x128xbf16>
    %cst = arith.constant dense<0.000000e+00> : vector<128x128xf32>
    %5 = tpu.matmul %3, %4, %cst {dimension_numbers = #tpu.dot_dimension_numbers<[1], [0], [0], [1], [0, 0, 1, 1], [], []>} : vector<128x128xbf16>, vector<128x128xbf16>, vector<128x128xf32> -> vector<128x128xf32>
    %c0_4 = arith.constant 0 : index
    %c0_5 = arith.constant 0 : index
    %6 = vector.load %arg5[%c0_4, %c0_5] : memref<1x128xf32, #tpu.memory_space<vmem>>, vector<1x128xf32>
    %7 = vector.broadcast %6 : vector<1x128xf32> to vector<128x128xf32>
    %8 = arith.addf %5, %7 : vector<128x128xf32>
    %c0_6 = arith.constant 0 : index
    %c0_7 = arith.constant 0 : index
    %9 = vector.load %arg7[%c0_6, %c0_7] : memref<128x128xf32, #tpu.memory_space<vmem>>, vector<128x128xf32>
    %c0_8 = arith.constant 0 : index
    %c0_9 = arith.constant 0 : index
    %10 = vector.load %arg2[%c0_8, %c0_9] : memref<128x128xbf16, #tpu.memory_space<vmem>>, vector<128x128xbf16>
    %11 = arith.truncf %8 : vector<128x128xf32> to vector<128x128xbf16>
    %cst_10 = arith.constant dense<0.000000e+00> : vector<128x128xf32>
    %12 = tpu.matmul %10, %11, %cst_10 {dimension_numbers = #tpu.dot_dimension_numbers<[1], [0], [0], [1], [0, 0, 1, 1], [], []>} : vector<128x128xbf16>, vector<128x128xbf16>, vector<128x128xf32> -> vector<128x128xf32>
    %13 = arith.addf %9, %12 : vector<128x128xf32>
    %c0_11 = arith.constant 0 : index
    %c0_12 = arith.constant 0 : index
    %14 = vector.load %arg7[%c0_11, %c0_12] : memref<128x128xf32, #tpu.memory_space<vmem>>, vector<128x128xf32>
    tpu.vector_store %arg7[%c0_11, %c0_12], %13 {strides = array<i32>} : memref<128x128xf32, #tpu.memory_space<vmem>>, vector<128x128xf32>,
    %c2_i32 = arith.constant 2 : i32
    %15 = arith.cmpi eq, %arg1, %c2_i32 : i32
    %16 = arith.extui %15 : i1 to i32
    %c0_i32_13 = arith.constant 0 : i32
    %17 = arith.cmpi ne, %16, %c0_i32_13 : i32
    scf.if %17 {
      %c0_14 = arith.constant 0 : index
      %c0_15 = arith.constant 0 : index
      %18 = vector.load %arg7[%c0_14, %c0_15] : memref<128x128xf32, #tpu.memory_space<vmem>>, vector<128x128xf32>
      %cst_16 = arith.constant 0.000000e+00 : f32
      %19 = vector.broadcast %cst_16 : f32 to vector<128x128xf32>
      %20 = arith.maximumf %18, %19 : vector<128x128xf32>
      %21 = arith.truncf %20 : vector<128x128xf32> to vector<128x128xbf16>
      %c0_17 = arith.constant 0 : index
      %c0_18 = arith.constant 0 : index
      %22 = vector.load %arg6[%c0_17, %c0_18] : memref<128x128xbf16, #tpu.memory_space<vmem>>, vector<128x128xbf16>
      tpu.vector_store %arg6[%c0_17, %c0_18], %21 {strides = array<i32>} : memref<128x128xbf16, #tpu.memory_space<vmem>>, vector<128x128xbf16>,
    } else {
    }
    return
  }
  func.func @transform_0(%arg0: i32, %arg1: i32) -> (i32, i32) {
    %c0_i32 = arith.constant 0 : i32
    return %arg0, %arg1 : i32, i32
  }
  func.func @transform_1(%arg0: i32, %arg1: i32) -> (i32, i32) {
    %c0_i32 = arith.constant 0 : i32
    %c0_i32_0 = arith.constant 0 : i32
    return %arg1, %c0_i32 : i32, i32
  }
  func.func @transform_2(%arg0: i32, %arg1: i32) -> (i32, i32) {
    %c0_i32 = arith.constant 0 : i32
    %c0_i32_0 = arith.constant 0 : i32
    %c0_i32_1 = arith.constant 0 : i32
    return %c0_i32, %c0_i32_0 : i32, i32
  }
  func.func @transform_3(%arg0: i32, %arg1: i32) -> (i32, i32) {
    %c0_i32 = arith.constant 0 : i32
    %c0_i32_0 = arith.constant 0 : i32
    %c0_i32_1 = arith.constant 0 : i32
    return %c0_i32, %c0_i32_0 : i32, i32
  }
  func.func @transform_4(%arg0: i32, %arg1: i32) -> (i32, i32) {
    %c0_i32 = arith.constant 0 : i32
    %c0_i32_0 = arith.constant 0 : i32
    return %arg0, %c0_i32 : i32, i32
  }
}

</mosaic_0001>

<llo_original>
// kernel: tpu_custom_call.1
$region0: #{tpu_custom_call.1}
  #allocation0 [shape = 'u32[]', space=smem, size = 0x4, offset = 0x4, fixed_abs, tag = 'smem constant byte address 0x4 - core index']
  #allocation1 [shape = 'u32[72,128]{1,0:T(1,128)}', space=vmem, size = 0x9000, scoped, tag = 'internal scratch']
  #allocation2 [shape = 'f32[128,128]{1,0:T(8,128)}', space=vmem, size = 0x10000, scoped, tag = 'scratch operand']
  %s0 = inlined_call_operand.hbm [shape: bf16[384,384], index: 0, kind: input, shape index: {}]
  %s1 = inlined_call_operand.hbm [shape: bf16[384,128], index: 1, kind: input, shape index: {}]
  %s2 = inlined_call_operand.hbm [shape: bf16[128,128], index: 2, kind: input, shape index: {}]
  %s3 = inlined_call_operand.vmem [shape: f32[1,128], index: 3, kind: input, shape index: {}]
  %s4 = inlined_call_operand.hbm [shape: bf16[384,128], index: 4, kind: output, shape index: {}]
  %s5 = sld [smem:[#allocation0]]
  $region69: #{tpu_custom_call.1} parent=0
    _
  %s7 = ssub.s32 1, %s5
  %s8 = scalar_select 0, %s7, %s5
  $region1: #{tpu_custom_call.1} parent=0
    #allocation3 [shape = 'u8[65536]{0}', space=vmem, size = 0x10000, scoped, tag = 'input window, operand 0']
    #allocation4 [shape = 's32[2]{0}', space=sflag, size = 0x8, scoped, tag = 'scoped memory for tpu_custom_call.1']
    #allocation5 [shape = 's32[2]{0}', space=sflag, size = 0x8, scoped, tag = 'scoped memory for tpu_custom_call.1']
    #allocation6 [shape = 'u8[65536]{0}', space=vmem, size = 0x10000, scoped, tag = 'input window, operand 1']
    #allocation7 [shape = 's32[2]{0}', space=sflag, size = 0x8, scoped, tag = 'scoped memory for tpu_custom_call.1']
    #allocation8 [shape = 'u8[32768]{0}', space=vmem, size = 0x8000, scoped, tag = 'input window, operand 2, single buffered']
    #allocation9 [shape = 'u8[65536]{0}', space=vmem, size = 0x10000, scoped, tag = 'output window, operand 0']
    %9 = vsyncpa [#allocation4], 0
    %s10 = scalar_lea.sflag [#allocation4], 1
    %11 = vsyncpa %s10, 0
    %12 = vsyncpa [#allocation7], 0
    %s13 = scalar_lea.sflag [#allocation7], 1
    %14 = vsyncpa %s13, 0
    %15 = vsyncpa [#allocation5], 0
    %s16 = scalar_lea.sflag [#allocation5], 1
    %17 = vsyncpa %s16, 0
    loop: start=0, step=1, limit=11
    $region2: #{tpu_custom_call.1} parent=1 // loop_pre_header
      _
    $region3: #{tpu_custom_call.1} parent=1 // loop_header
      %s19 = sphi 0, %s23
      %p20 = scmp.ge.s32.totalorder %s19, 11
      %s26 = sphi 0, %s38
      %s27 = sphi 0, %s34
      %s28 = sphi 0, %s26
      %s29 = sphi 0, %s27
      %s30 = sphi 0, %s28
      %s31 = sphi 0, %s29
      %s43 = sphi 0, %s45
      %s46 = sphi 0, %s43
      %s47 = sphi 0, %s46
      %s63 = sphi 0, %s47
      %s69 = sphi 0, %s71
      %s72 = sphi 0, %s69
      %s73 = sphi 0, %s72
      %s89 = sphi 0, %s73
      %s93 = sphi 0, %s93
      %s95 = sphi 0, %s93
      %s96 = sphi 0, %s95
      %s110 = sphi 0, %s96
      %s114 = sphi 0, %s114
      %s116 = sphi 0, %s114
      %s117 = sphi 0, %s116
      %s131 = sphi 0, %s117
      %s137 = sphi 0, %s139
      %s140 = sphi 0, %s137
      %s141 = sphi 0, %s140
      %s157 = sphi 0, %s141
    $region4: #{tpu_custom_call.1} parent=1 // loop_header_branch
      %22 = sbr.rel (%p20) target = $region8
    $region5: #{tpu_custom_call.1} parent=1 // loop_body
      %s24 = ssub.s32 %s19, 1
      %s25 = ssub.s32 %s19, 2
      %s32 = sadd.s32 1, %s27
      %p33 = scmp.ge.s32.totalorder %s32, 3
      %s34 = scalar_select %p33, 0, %s32
      %s35 = sadd.s32 1, %s26
      %s36 = scalar_select %p33, %s35, %s26
      %p37 = scmp.ge.s32.totalorder %s36, 3
      %s38 = scalar_select %p37, 0, %s36
      %s39 = ssub.s32 %s26, %s38
      %s40 = ssub.s32 %s27, %s34
      %s41 = sor.u32 %s39, %s40
      %p42 = scmp.eq.s32.totalorder %s41, 0
      %s44 = sadd.s32 %s43, 1
      %s45 = scalar_select %p42, %s43, %s44
      %p48 = pneg %p42
      %p49 = scmp.eq.s32.totalorder %s19, 8
      %p50 = por %p48, %p49
      %p51 = scmp.ne.s32.totalorder %s43, %s46
      %p52 = scmp.eq.s32.totalorder %s19, 0
      %p53 = por %p51, %p52
      %p54 = scmp.ne.s32.totalorder %s43, %s46
      %p55 = scmp.eq.s32.totalorder %s24, 8
      %p56 = por %p54, %p55
      %p57 = scmp.ne.s32.totalorder %s46, %s47
      %p58 = scmp.eq.s32.totalorder %s24, 0
      %p59 = por %p57, %p58
      %p60 = scmp.ne.s32.totalorder %s46, %s47
      %p61 = scmp.eq.s32.totalorder %s25, 8
      %p62 = por %p60, %p61
      %p64 = scmp.ne.s32.totalorder %s47, %s63
      %p65 = scmp.eq.s32.totalorder %s25, 0
      %p66 = por %p64, %p65
      %s67 = ssub.s32 %s27, %s34
      %p68 = scmp.eq.s32.totalorder %s67, 0
      %s70 = sadd.s32 %s69, 1
      %s71 = scalar_select %p68, %s69, %s70
      %p74 = pneg %p68
      %p75 = scmp.eq.s32.totalorder %s19, 8
      %p76 = por %p74, %p75
      %p77 = scmp.ne.s32.totalorder %s69, %s72
      %p78 = scmp.eq.s32.totalorder %s19, 0
      %p79 = por %p77, %p78
      %p80 = scmp.ne.s32.totalorder %s69, %s72
      %p81 = scmp.eq.s32.totalorder %s24, 8
      %p82 = por %p80, %p81
      %p83 = scmp.ne.s32.totalorder %s72, %s73
      %p84 = scmp.eq.s32.totalorder %s24, 0
      %p85 = por %p83, %p84
      %p86 = scmp.ne.s32.totalorder %s72, %s73
      %p87 = scmp.eq.s32.totalorder %s25, 8
      %p88 = por %p86, %p87
      %p90 = scmp.ne.s32.totalorder %s73, %s89
      %p91 = scmp.eq.s32.totalorder %s25, 0
      %p92 = por %p90, %p91
      %s94 = sadd.s32 %s93, 1
      %p97 = scmp.eq.s32.totalorder %s19, 8
      %p98 = scmp.ne.s32.totalorder %s93, %s95
      %p99 = scmp.eq.s32.totalorder %s19, 0
      %p100 = por %p98, %p99
      %p101 = scmp.ne.s32.totalorder %s93, %s95
      %p102 = scmp.eq.s32.totalorder %s24, 8
      %p103 = por %p101, %p102
      %p104 = scmp.ne.s32.totalorder %s95, %s96
      %p105 = scmp.eq.s32.totalorder %s24, 0
      %p106 = por %p104, %p105
      %p107 = scmp.ne.s32.totalorder %s95, %s96
      %p108 = scmp.eq.s32.totalorder %s25, 8
      %p109 = por %p107, %p108
      %p111 = scmp.ne.s32.totalorder %s96, %s110
      %p112 = scmp.eq.s32.totalorder %s25, 0
      %p113 = por %p111, %p112
      %s115 = sadd.s32 %s114, 1
      %p118 = scmp.eq.s32.totalorder %s19, 8
      %p119 = scmp.ne.s32.totalorder %s114, %s116
      %p120 = scmp.eq.s32.totalorder %s19, 0
      %p121 = por %p119, %p120
      %p122 = scmp.ne.s32.totalorder %s114, %s116
      %p123 = scmp.eq.s32.totalorder %s24, 8
      %p124 = por %p122, %p123
      %p125 = scmp.ne.s32.totalorder %s116, %s117
      %p126 = scmp.eq.s32.totalorder %s24, 0
      %p127 = por %p125, %p126
      %p128 = scmp.ne.s32.totalorder %s116, %s117
      %p129 = scmp.eq.s32.totalorder %s25, 8
      %p130 = por %p128, %p129
      %p132 = scmp.ne.s32.totalorder %s117, %s131
      %p133 = scmp.eq.s32.totalorder %s25, 0
      %p134 = por %p132, %p133
      %s135 = ssub.s32 %s26, %s38
      %p136 = scmp.eq.s32.totalorder %s135, 0
      %s138 = sadd.s32 %s137, 1
      %s139 = scalar_select %p136, %s137, %s138
      %p142 = pneg %p136
      %p143 = scmp.eq.s32.totalorder %s19, 8
      %p144 = por %p142, %p143
      %p145 = scmp.ne.s32.totalorder %s137, %s140
      %p146 = scmp.eq.s32.totalorder %s19, 0
      %p147 = por %p145, %p146
      %p148 = scmp.ne.s32.totalorder %s137, %s140
      %p149 = scmp.eq.s32.totalorder %s24, 8
      %p150 = por %p148, %p149
      %p151 = scmp.ne.s32.totalorder %s140, %s141
      %p152 = scmp.eq.s32.totalorder %s24, 0
      %p153 = por %p151, %p152
      %p154 = scmp.ne.s32.totalorder %s140, %s141
      %p155 = scmp.eq.s32.totalorder %s25, 8
      %p156 = por %p154, %p155
      %p158 = scmp.ne.s32.totalorder %s141, %s157
      %p159 = scmp.eq.s32.totalorder %s25, 0
      %p160 = por %p158, %p159
      %p161 = scmp.le.s32.totalorder 1, %s19
      %p162 = scmp.lt.s32.totalorder %s19, 10
      %p163 = pnand %p161, %p162
      %p164 = pneg %p163
      // Predicated region
      $region9: #{tpu_custom_call.1} parent=5 // pred_check
        _
      $region10: #{tpu_custom_call.1} parent=5 // pred_check_branch
        %166 = sbr.rel (%p163) target = $region12
      $region11: #{tpu_custom_call.1} parent=5 // pred_region
        %s167 = ssub.s32 %s19, 1
        // Predicated region
        $region13: #{tpu_custom_call.1} parent=11 // pred_check
          %p168 = pneg %p106
        $region14: #{tpu_custom_call.1} parent=11 // pred_check_branch
          %170 = sbr.rel (%p168) target = $region16
        $region15: #{tpu_custom_call.1} parent=11 // pred_region
          %172 = vsyncadd [#allocation7], 0
          %s173 = sshll.u32 %s2, 4
          %s174 = int_to_ptr.hbm [resolvable:$true] %s173
          %s175 = sshll.u32 [#allocation8], 4
          %s176 = int_to_ptr.vmem [resolvable:$true] %s175
          %181 = dma.hbm_to_vmem [thread:$0]  %s174, 1024, %s176, [#allocation7], 64, 64, 4
        $region16: #{tpu_custom_call.1} parent=11 // pred_fallthru
          _
        // Predicated region
        $region17: #{tpu_custom_call.1} parent=11 // pred_check
          %p182 = pneg %p127
        $region18: #{tpu_custom_call.1} parent=11 // pred_check_branch
          %184 = sbr.rel (%p182) target = $region20
        $region19: #{tpu_custom_call.1} parent=11 // pred_region
          _
        $region20: #{tpu_custom_call.1} parent=11 // pred_fallthru
          _
      $region12: #{tpu_custom_call.1} parent=5 // pred_fallthru
        _
      %p185 = scmp.lt.s32.totalorder %s19, 9
      // Predicated region
      $region21: #{tpu_custom_call.1} parent=5 // pred_check
        %p186 = pneg %p185
      $region22: #{tpu_custom_call.1} parent=5 // pred_check_branch
        %188 = sbr.rel (%p186) target = $region24
      $region23: #{tpu_custom_call.1} parent=5 // pred_region
        // Predicated region
        $region25: #{tpu_custom_call.1} parent=23 // pred_check
          %p189 = pneg %p53
        $region26: #{tpu_custom_call.1} parent=23 // pred_check_branch
          %191 = sbr.rel (%p189) target = $region28
        $region27: #{tpu_custom_call.1} parent=23 // pred_region
          %s192 = sand.u32 %s43, 1
          %s193 = scalar_lea.sflag [#allocation4], %s192
          %s194 = sand.u32 %s43, 1
          %s195 = smul.addr %s194, 64
          %s196 = scalar_lea.vmem [#allocation3], %s195
          %s197 = smul.u32 16, %s26
          %199 = vsyncadd %s193, 0
          %s200 = smul.addr %s197, 3
          %s201 = sadd.s32 %s27, %s200
          %s202 = smul.addr %s201, 4
          %s203 = scalar_lea.hbm %s0, %s202
          %s204 = sshll.u32 %s203, 4
          %s205 = int_to_ptr.hbm [resolvable:$true] %s204
          %s206 = sshll.u32 %s196, 4
          %s207 = int_to_ptr.vmem [resolvable:$true] %s206
          %212 = dma.hbm_to_vmem [thread:$0]  %s205, 1024, %s207, %s193, 192, 64, 4
        $region28: #{tpu_custom_call.1} parent=23 // pred_fallthru
          _
        // Predicated region
        $region29: #{tpu_custom_call.1} parent=23 // pred_check
          %p213 = pneg %p79
        $region30: #{tpu_custom_call.1} parent=23 // pred_check_branch
          %215 = sbr.rel (%p213) target = $region32
        $region31: #{tpu_custom_call.1} parent=23 // pred_region
          %s216 = sand.u32 %s19, 1
          %s217 = scalar_lea.sflag [#allocation7], %s216
          %s218 = sand.u32 %s69, 1
          %s219 = smul.addr %s218, 64
          %s220 = scalar_lea.vmem [#allocation6], %s219
          %s221 = smul.u32 16, %s27
          %223 = vsyncadd %s217, 0
          %s224 = smul.addr %s221, 4
          %s225 = scalar_lea.hbm %s1, %s224
          %s226 = sshll.u32 %s225, 4
          %s227 = int_to_ptr.hbm [resolvable:$true] %s226
          %s228 = sshll.u32 %s220, 4
          %s229 = int_to_ptr.vmem [resolvable:$true] %s228
          %234 = dma.hbm_to_vmem [thread:$0]  %s227, 1024, %s229, %s217, 64, 64, 4
        $region32: #{tpu_custom_call.1} parent=23 // pred_fallthru
          _
      $region24: #{tpu_custom_call.1} parent=5 // pred_fallthru
        _
      %p235 = scmp.le.s32.totalorder 1, %s19
      %p236 = scmp.lt.s32.totalorder %s19, 10
      %p237 = pnand %p235, %p236
      %p238 = pneg %p237
      // Predicated region
      $region33: #{tpu_custom_call.1} parent=5 // pred_check
        _
      $region34: #{tpu_custom_call.1} parent=5 // pred_check_branch
        %240 = sbr.rel (%p237) target = $region36
      $region35: #{tpu_custom_call.1} parent=5 // pred_region
        %s241 = ssub.s32 %s19, 1
        %s242 = sand.u32 %s46, 1
        %s243 = scalar_lea.sflag [#allocation4], %s242
        %s244 = sand.u32 %s46, 1
        %s245 = smul.addr %s244, 64
        %s246 = scalar_lea.vmem [#allocation3], %s245
        // Predicated region
        $region37: #{tpu_custom_call.1} parent=35 // pred_check
          %p247 = pneg %p59
        $region38: #{tpu_custom_call.1} parent=35 // pred_check_branch
          %249 = sbr.rel (%p247) target = $region40
        $region39: #{tpu_custom_call.1} parent=35 // pred_region
          %251 = dma.done %s243, 1024
        $region40: #{tpu_custom_call.1} parent=35 // pred_fallthru
          _
        %s252 = sand.u32 %s24, 1
        %s253 = scalar_lea.sflag [#allocation7], %s252
        %s254 = sand.u32 %s72, 1
        %s255 = smul.addr %s254, 64
        %s256 = scalar_lea.vmem [#allocation6], %s255
        // Predicated region
        $region41: #{tpu_custom_call.1} parent=35 // pred_check
          %p257 = pneg %p85
        $region42: #{tpu_custom_call.1} parent=35 // pred_check_branch
          %259 = sbr.rel (%p257) target = $region44
        $region43: #{tpu_custom_call.1} parent=35 // pred_region
          %261 = dma.done %s253, 1024
        $region44: #{tpu_custom_call.1} parent=35 // pred_fallthru
          _
        // Predicated region
        $region45: #{tpu_custom_call.1} parent=35 // pred_check
          %p262 = pneg %p106
        $region46: #{tpu_custom_call.1} parent=35 // pred_check_branch
          %264 = sbr.rel (%p262) target = $region48
        $region47: #{tpu_custom_call.1} parent=35 // pred_region
          %266 = dma.done [#allocation7], 1024
        $region48: #{tpu_custom_call.1} parent=35 // pred_fallthru
          _
        %s267 = sand.u32 %s46, 1
        %s268 = scalar_lea.sflag [#allocation4], %s267
        %s269 = sand.u32 %s46, 1
        %s270 = smul.addr %s269, 64
        %s271 = scalar_lea.vmem [#allocation3], %s270
        %p272 = pneg %p59
        %p273 = pneg %p56
        %s274 = sand.u32 %s24, 1
        %s275 = scalar_lea.sflag [#allocation7], %s274
        %s276 = sand.u32 %s72, 1
        %s277 = smul.addr %s276, 64
        %s278 = scalar_lea.vmem [#allocation6], %s277
        %p279 = pneg %p85
        %p280 = pneg %p82
        %p281 = pneg %p106
        %p282 = pneg %p103
        %p283 = pneg %p127
        %p284 = pneg %p124
        %p285 = pneg %p153
        %p286 = pneg %p150
        %s287 = sand.u32 %s140, 1
        %s288 = scalar_lea.sflag [#allocation5], %s287
        %s289 = sand.u32 %s140, 1
        %s290 = smul.addr %s289, 64
        %s291 = scalar_lea.vmem [#allocation9], %s290
        %s292 = smul.u32 16, %s28
        %s293 = smul.u32 16, %s29
        %s294 = smul.u32 16, %s28
        %p295 = scmp.eq.s32.totalorder %s29, 0
        // Predicated region
        $region49: #{tpu_custom_call.1} parent=35 // pred_check
          %p296 = pneg %p295
        $region50: #{tpu_custom_call.1} parent=35 // pred_check_branch
          %298 = sbr.rel (%p296) target = $region52
        $region51: #{tpu_custom_call.1} parent=35 // pred_region
          %299 = vst [vmem:[#allocation2] sm:$0xff] 0.0
          %300 = vst [vmem:[#allocation2 + $0x8] sm:$0xff] 0.0
          %301 = vst [vmem:[#allocation2 + $0x10] sm:$0xff] 0.0
          %302 = vst [vmem:[#allocation2 + $0x18] sm:$0xff] 0.0
          %303 = vst [vmem:[#allocation2 + $0x20] sm:$0xff] 0.0
          %304 = vst [vmem:[#allocation2 + $0x28] sm:$0xff] 0.0
          %305 = vst [vmem:[#allocation2 + $0x30] sm:$0xff] 0.0
          %306 = vst [vmem:[#allocation2 + $0x38] sm:$0xff] 0.0
          %307 = vst [vmem:[#allocation2 + $0x40] sm:$0xff] 0.0
          %308 = vst [vmem:[#allocation2 + $0x48] sm:$0xff] 0.0
          %309 = vst [vmem:[#allocation2 + $0x50] sm:$0xff] 0.0
          %310 = vst [vmem:[#allocation2 + $0x58] sm:$0xff] 0.0
          %311 = vst [vmem:[#allocation2 + $0x60] sm:$0xff] 0.0
          %312 = vst [vmem:[#allocation2 + $0x68] sm:$0xff] 0.0
          %313 = vst [vmem:[#allocation2 + $0x70] sm:$0xff] 0.0
          %314 = vst [vmem:[#allocation2 + $0x78] sm:$0xff] 0.0
        $region52: #{tpu_custom_call.1} parent=35 // pred_fallthru
          _
        %v315 = vld [vmem:[%s256] sm:$0xf]
        %v316 = vld [vmem:[%s256 + $0x4] sm:$0xf]
        %v317 = vld [vmem:[%s256 + $0x8] sm:$0xf]
        %v318 = vld [vmem:[%s256 + $0xc] sm:$0xf]
        %v319 = vld [vmem:[%s256 + $0x10] sm:$0xf]
        %v320 = vld [vmem:[%s256 + $0x14] sm:$0xf]
        %v321 = vld [vmem:[%s256 + $0x18] sm:$0xf]
        %v322 = vld [vmem:[%s256 + $0x1c] sm:$0xf]
        %v323 = vld [vmem:[%s256 + $0x20] sm:$0xf]
        %v324 = vld [vmem:[%s256 + $0x24] sm:$0xf]
        %v325 = vld [vmem:[%s256 + $0x28] sm:$0xf]
        %v326 = vld [vmem:[%s256 + $0x2c] sm:$0xf]
        %v327 = vld [vmem:[%s256 + $0x30] sm:$0xf]
        %v328 = vld [vmem:[%s256 + $0x34] sm:$0xf]
        %v329 = vld [vmem:[%s256 + $0x38] sm:$0xf]
        %v330 = vld [vmem:[%s256 + $0x3c] sm:$0xf]
        %v331 = vld [vmem:[#allocation8] sm:$0xf]
        %v332 = vld [vmem:[#allocation8 + $0x4] sm:$0xf]
        %v333 = vld [vmem:[#allocation8 + $0x8] sm:$0xf]
        %v334 = vld [vmem:[#allocation8 + $0xc] sm:$0xf]
        %v335 = vld [vmem:[#allocation8 + $0x10] sm:$0xf]
        %v336 = vld [vmem:[#allocation8 + $0x14] sm:$0xf]
        %v337 = vld [vmem:[#allocation8 + $0x18] sm:$0xf]
        %v338 = vld [vmem:[#allocation8 + $0x1c] sm:$0xf]
        %v339 = vld [vmem:[#allocation8 + $0x20] sm:$0xf]
        %v340 = vld [vmem:[#allocation8 + $0x24] sm:$0xf]
        %v341 = vld [vmem:[#allocation8 + $0x28] sm:$0xf]
        %v342 = vld [vmem:[#allocation8 + $0x2c] sm:$0xf]
        %v343 = vld [vmem:[#allocation8 + $0x30] sm:$0xf]
        %v344 = vld [vmem:[#allocation8 + $0x34] sm:$0xf]
        %v345 = vld [vmem:[#allocation8 + $0x38] sm:$0xf]
        %v346 = vld [vmem:[#allocation8 + $0x3c] sm:$0xf]
        %v347 = vld [vmem:[%s3] sm:$0x1]
        %v349 = vperm.slane %v347, 0
        %v367 = vunpack.c.l.b16 %v315
        %v368 = vunpack.c.l.b16 %v316
        %v369 = vunpack.c.l.b16 %v317
        %v370 = vunpack.c.l.b16 %v318
        %v371 = vunpack.c.l.b16 %v319
        %v372 = vunpack.c.l.b16 %v320
        %v373 = vunpack.c.l.b16 %v321
        %v374 = vunpack.c.l.b16 %v322
        %v375 = vunpack.c.l.b16 %v323
        %v376 = vunpack.c.l.b16 %v324
        %v377 = vunpack.c.l.b16 %v325
        %v378 = vunpack.c.l.b16 %v326
        %v379 = vunpack.c.l.b16 %v327
        %v380 = vunpack.c.l.b16 %v328
        %v381 = vunpack.c.l.b16 %v329
        %v382 = vunpack.c.l.b16 %v330
        %v383 = vpack.c.b16 %v368, %v367
        %v384 = vpack.c.b16 %v370, %v369
        %v385 = vpack.c.b16 %v372, %v371
        %v386 = vpack.c.b16 %v374, %v373
        %v387 = vpack.c.b16 %v376, %v375
        %v388 = vpack.c.b16 %v378, %v377
        %v389 = vpack.c.b16 %v380, %v379
        %v390 = vpack.c.b16 %v382, %v381
        %v415 = vunpack.c.l.b16 %v331
        %v416 = vunpack.c.l.b16 %v332
        %v417 = vunpack.c.l.b16 %v333
        %v418 = vunpack.c.l.b16 %v334
        %v419 = vunpack.c.l.b16 %v335
        %v420 = vunpack.c.l.b16 %v336
        %v421 = vunpack.c.l.b16 %v337
        %v422 = vunpack.c.l.b16 %v338
        %v423 = vunpack.c.l.b16 %v339
        %v424 = vunpack.c.l.b16 %v340
        %v425 = vunpack.c.l.b16 %v341
        %v426 = vunpack.c.l.b16 %v342
        %v427 = vunpack.c.l.b16 %v343
        %v428 = vunpack.c.l.b16 %v344
        %v429 = vunpack.c.l.b16 %v345
        %v430 = vunpack.c.l.b16 %v346
        %v431 = vpack.c.b16 %v416, %v415
        %v432 = vpack.c.b16 %v418, %v417
        %v433 = vpack.c.b16 %v420, %v419
        %v434 = vpack.c.b16 %v422, %v421
        %v435 = vpack.c.b16 %v424, %v423
        %v436 = vpack.c.b16 %v426, %v425
        %v437 = vpack.c.b16 %v428, %v427
        %v438 = vpack.c.b16 %v430, %v429
        %447 = vmatpush.bf16.msra.mxu0 %v438
        %448 = vmatpush.bf16.msra.mxu0 %v437
        %449 = vmatpush.bf16.msra.mxu0 %v436
        %450 = vmatpush.bf16.msra.mxu0 %v435
        %451 = vmatpush.bf16.msra.mxu0 %v434
        %452 = vmatpush.bf16.msra.mxu0 %v433
        %453 = vmatpush.bf16.msra.mxu0 %v432
        %454 = vmatpush.bf16.msra.mxu0 %v431
        %455 = vmatmul.bf16.gmra.mxu0 %v383
        %v456 = vpop.f32.mrf.mxu0
        %v457 = vadd.f32 %v349, %v456
        %v458 = vpop.f32.mrf.mxu0
        %v459 = vadd.f32 %v349, %v458
        %460 = vmatmul.bf16.gmra.mxu0 %v384
        %v461 = vpop.f32.mrf.mxu0
        %v462 = vadd.f32 %v349, %v461
        %v463 = vpop.f32.mrf.mxu0
        %v464 = vadd.f32 %v349, %v463
        %465 = vmatmul.bf16.gmra.mxu0 %v385
        %v466 = vpop.f32.mrf.mxu0
        %v467 = vadd.f32 %v349, %v466
        %v468 = vpop.f32.mrf.mxu0
        %v469 = vadd.f32 %v349, %v468
        %470 = vmatmul.bf16.gmra.mxu0 %v386
        %v471 = vpop.f32.mrf.mxu0
        %v472 = vadd.f32 %v349, %v471
        %v473 = vpop.f32.mrf.mxu0
        %v474 = vadd.f32 %v349, %v473
        %475 = vmatmul.bf16.gmra.mxu0 %v387
        %v476 = vpop.f32.mrf.mxu0
        %v477 = vadd.f32 %v349, %v476
        %v478 = vpop.f32.mrf.mxu0
        %v479 = vadd.f32 %v349, %v478
        %480 = vmatmul.bf16.gmra.mxu0 %v388
        %v481 = vpop.f32.mrf.mxu0
        %v482 = vadd.f32 %v349, %v481
        %v483 = vpop.f32.mrf.mxu0
        %v484 = vadd.f32 %v349, %v483
        %485 = vmatmul.bf16.gmra.mxu0 %v389
        %v486 = vpop.f32.mrf.mxu0
        %v487 = vadd.f32 %v349, %v486
        %v488 = vpop.f32.mrf.mxu0
        %v489 = vadd.f32 %v349, %v488
        %490 = vmatmul.bf16.gmra.mxu0 %v390
        %v491 = vpop.f32.mrf.mxu0
        %v492 = vadd.f32 %v349, %v491
        %v493 = vpop.f32.mrf.mxu0
        %v494 = vadd.f32 %v349, %v493
        %495 = vdwg.mxu0
        %v496 = vld [vmem:[#allocation2] sm:$0xff]
        %v497 = vld [vmem:[#allocation2 + $0x8] sm:$0xff]
        %v498 = vld [vmem:[#allocation2 + $0x10] sm:$0xff]
        %v499 = vld [vmem:[#allocation2 + $0x18] sm:$0xff]
        %v500 = vld [vmem:[#allocation2 + $0x20] sm:$0xff]
        %v501 = vld [vmem:[#allocation2 + $0x28] sm:$0xff]
        %v502 = vld [vmem:[#allocation2 + $0x30] sm:$0xff]
        %v503 = vld [vmem:[#allocation2 + $0x38] sm:$0xff]
        %v504 = vld [vmem:[#allocation2 + $0x40] sm:$0xff]
        %v505 = vld [vmem:[#allocation2 + $0x48] sm:$0xff]
        %v506 = vld [vmem:[#allocation2 + $0x50] sm:$0xff]
        %v507 = vld [vmem:[#allocation2 + $0x58] sm:$0xff]
        %v508 = vld [vmem:[#allocation2 + $0x60] sm:$0xff]
        %v509 = vld [vmem:[#allocation2 + $0x68] sm:$0xff]
        %v510 = vld [vmem:[#allocation2 + $0x70] sm:$0xff]
        %v511 = vld [vmem:[#allocation2 + $0x78] sm:$0xff]
        %v512 = vld [vmem:[%s246] sm:$0xf]
        %v513 = vld [vmem:[%s246 + $0x4] sm:$0xf]
        %v514 = vld [vmem:[%s246 + $0x8] sm:$0xf]
        %v515 = vld [vmem:[%s246 + $0xc] sm:$0xf]
        %v516 = vld [vmem:[%s246 + $0x10] sm:$0xf]
        %v517 = vld [vmem:[%s246 + $0x14] sm:$0xf]
        %v518 = vld [vmem:[%s246 + $0x18] sm:$0xf]
        %v519 = vld [vmem:[%s246 + $0x1c] sm:$0xf]
        %v520 = vld [vmem:[%s246 + $0x20] sm:$0xf]
        %v521 = vld [vmem:[%s246 + $0x24] sm:$0xf]
        %v522 = vld [vmem:[%s246 + $0x28] sm:$0xf]
        %v523 = vld [vmem:[%s246 + $0x2c] sm:$0xf]
        %v524 = vld [vmem:[%s246 + $0x30] sm:$0xf]
        %v525 = vld [vmem:[%s246 + $0x34] sm:$0xf]
        %v526 = vld [vmem:[%s246 + $0x38] sm:$0xf]
        %v527 = vld [vmem:[%s246 + $0x3c] sm:$0xf]
        %v528 = vpack.c.bf16 %v459, %v457
        %v529 = vpack.c.bf16 %v464, %v462
        %v530 = vpack.c.bf16 %v469, %v467
        %v531 = vpack.c.bf16 %v474, %v472
        %v532 = vpack.c.bf16 %v479, %v477
        %v533 = vpack.c.bf16 %v484, %v482
        %v534 = vpack.c.bf16 %v489, %v487
        %v535 = vpack.c.bf16 %v494, %v492
        %v552 = vunpack.c.l.b16 %v512
        %v553 = vunpack.c.l.b16 %v513
        %v554 = vunpack.c.l.b16 %v514
        %v555 = vunpack.c.l.b16 %v515
        %v556 = vunpack.c.l.b16 %v516
        %v557 = vunpack.c.l.b16 %v517
        %v558 = vunpack.c.l.b16 %v518
        %v559 = vunpack.c.l.b16 %v519
        %v560 = vunpack.c.l.b16 %v520
        %v561 = vunpack.c.l.b16 %v521
        %v562 = vunpack.c.l.b16 %v522
        %v563 = vunpack.c.l.b16 %v523
        %v564 = vunpack.c.l.b16 %v524
        %v565 = vunpack.c.l.b16 %v525
        %v566 = vunpack.c.l.b16 %v526
        %v567 = vunpack.c.l.b16 %v527
        %v568 = vpack.c.b16 %v553, %v552
        %v569 = vpack.c.b16 %v555, %v554
        %v570 = vpack.c.b16 %v557, %v556
        %v571 = vpack.c.b16 %v559, %v558
        %v572 = vpack.c.b16 %v561, %v560
        %v573 = vpack.c.b16 %v563, %v562
        %v574 = vpack.c.b16 %v565, %v564
        %v575 = vpack.c.b16 %v567, %v566
        %584 = vmatpush.bf16.msra.mxu0 %v535
        %585 = vmatpush.bf16.msra.mxu0 %v534
        %586 = vmatpush.bf16.msra.mxu0 %v533
        %587 = vmatpush.bf16.msra.mxu0 %v532
        %588 = vmatpush.bf16.msra.mxu0 %v531
        %589 = vmatpush.bf16.msra.mxu0 %v530
        %590 = vmatpush.bf16.msra.mxu0 %v529
        %591 = vmatpush.bf16.msra.mxu0 %v528
        %592 = vmatmul.bf16.gmra.mxu0 %v568
        %v593 = vpop.f32.mrf.mxu0
        %v594 = vadd.f32 0.0, %v593
        %v595 = vpop.f32.mrf.mxu0
        %v596 = vadd.f32 0.0, %v595
        %597 = vmatmul.bf16.gmra.mxu0 %v569
        %v598 = vpop.f32.mrf.mxu0
        %v599 = vadd.f32 0.0, %v598
        %v600 = vpop.f32.mrf.mxu0
        %v601 = vadd.f32 0.0, %v600
        %602 = vmatmul.bf16.gmra.mxu0 %v570
        %v603 = vpop.f32.mrf.mxu0
        %v604 = vadd.f32 0.0, %v603
        %v605 = vpop.f32.mrf.mxu0
        %v606 = vadd.f32 0.0, %v605
        %607 = vmatmul.bf16.gmra.mxu0 %v571
        %v608 = vpop.f32.mrf.mxu0
        %v609 = vadd.f32 0.0, %v608
        %v610 = vpop.f32.mrf.mxu0
        %v611 = vadd.f32 0.0, %v610
        %612 = vmatmul.bf16.gmra.mxu0 %v572
        %v613 = vpop.f32.mrf.mxu0
        %v614 = vadd.f32 0.0, %v613
        %v615 = vpop.f32.mrf.mxu0
        %v616 = vadd.f32 0.0, %v615
        %617 = vmatmul.bf16.gmra.mxu0 %v573
        %v618 = vpop.f32.mrf.mxu0
        %v619 = vadd.f32 0.0, %v618
        %v620 = vpop.f32.mrf.mxu0
        %v621 = vadd.f32 0.0, %v620
        %622 = vmatmul.bf16.gmra.mxu0 %v574
        %v623 = vpop.f32.mrf.mxu0
        %v624 = vadd.f32 0.0, %v623
        %v625 = vpop.f32.mrf.mxu0
        %v626 = vadd.f32 0.0, %v625
        %627 = vmatmul.bf16.gmra.mxu0 %v575
        %v628 = vpop.f32.mrf.mxu0
        %v629 = vadd.f32 0.0, %v628
        %v630 = vpop.f32.mrf.mxu0
        %v631 = vadd.f32 0.0, %v630
        %632 = vdwg.mxu0
        %v633 = vadd.f32 %v496, %v594
        %v634 = vadd.f32 %v497, %v596
        %v635 = vadd.f32 %v498, %v599
        %v636 = vadd.f32 %v499, %v601
        %v637 = vadd.f32 %v500, %v604
        %v638 = vadd.f32 %v501, %v606
        %v639 = vadd.f32 %v502, %v609
        %v640 = vadd.f32 %v503, %v611
        %v641 = vadd.f32 %v504, %v614
        %v642 = vadd.f32 %v505, %v616
        %v643 = vadd.f32 %v506, %v619
        %v644 = vadd.f32 %v507, %v621
        %v645 = vadd.f32 %v508, %v624
        %v646 = vadd.f32 %v509, %v626
        %v647 = vadd.f32 %v510, %v629
        %v648 = vadd.f32 %v511, %v631
        %649 = vst [vmem:[#allocation2] sm:$0xff] %v633
        %650 = vst [vmem:[#allocation2 + $0x8] sm:$0xff] %v634
        %651 = vst [vmem:[#allocation2 + $0x10] sm:$0xff] %v635
        %652 = vst [vmem:[#allocation2 + $0x18] sm:$0xff] %v636
        %653 = vst [vmem:[#allocation2 + $0x20] sm:$0xff] %v637
        %654 = vst [vmem:[#allocation2 + $0x28] sm:$0xff] %v638
        %655 = vst [vmem:[#allocation2 + $0x30] sm:$0xff] %v639
        %656 = vst [vmem:[#allocation2 + $0x38] sm:$0xff] %v640
        %657 = vst [vmem:[#allocation2 + $0x40] sm:$0xff] %v641
        %658 = vst [vmem:[#allocation2 + $0x48] sm:$0xff] %v642
        %659 = vst [vmem:[#allocation2 + $0x50] sm:$0xff] %v643
        %660 = vst [vmem:[#allocation2 + $0x58] sm:$0xff] %v644
        %661 = vst [vmem:[#allocation2 + $0x60] sm:$0xff] %v645
        %662 = vst [vmem:[#allocation2 + $0x68] sm:$0xff] %v646
        %663 = vst [vmem:[#allocation2 + $0x70] sm:$0xff] %v647
        %664 = vst [vmem:[#allocation2 + $0x78] sm:$0xff] %v648
        %p665 = scmp.eq.s32.totalorder %s29, 2
        // Predicated region
        $region53: #{tpu_custom_call.1} parent=35 // pred_check
          %p666 = pneg %p665
        $region54: #{tpu_custom_call.1} parent=35 // pred_check_branch
          %668 = sbr.rel (%p666) target = $region56
        $region55: #{tpu_custom_call.1} parent=35 // pred_region
          %v669 = vld [vmem:[#allocation2] sm:$0xff]
          %v670 = vld [vmem:[#allocation2 + $0x8] sm:$0xff]
          %v671 = vld [vmem:[#allocation2 + $0x10] sm:$0xff]
          %v672 = vld [vmem:[#allocation2 + $0x18] sm:$0xff]
          %v673 = vld [vmem:[#allocation2 + $0x20] sm:$0xff]
          %v674 = vld [vmem:[#allocation2 + $0x28] sm:$0xff]
          %v675 = vld [vmem:[#allocation2 + $0x30] sm:$0xff]
          %v676 = vld [vmem:[#allocation2 + $0x38] sm:$0xff]
          %v677 = vld [vmem:[#allocation2 + $0x40] sm:$0xff]
          %v678 = vld [vmem:[#allocation2 + $0x48] sm:$0xff]
          %v679 = vld [vmem:[#allocation2 + $0x50] sm:$0xff]
          %v680 = vld [vmem:[#allocation2 + $0x58] sm:$0xff]
          %v681 = vld [vmem:[#allocation2 + $0x60] sm:$0xff]
          %v682 = vld [vmem:[#allocation2 + $0x68] sm:$0xff]
          %v683 = vld [vmem:[#allocation2 + $0x70] sm:$0xff]
          %v684 = vld [vmem:[#allocation2 + $0x78] sm:$0xff]
          %v685 = vmax.f32 %v669, 0.0
          %v686 = vmax.f32 %v670, 0.0
          %v687 = vmax.f32 %v671, 0.0
          %v688 = vmax.f32 %v672, 0.0
          %v689 = vmax.f32 %v673, 0.0
          %v690 = vmax.f32 %v674, 0.0
          %v691 = vmax.f32 %v675, 0.0
          %v692 = vmax.f32 %v676, 0.0
          %v693 = vmax.f32 %v677, 0.0
          %v694 = vmax.f32 %v678, 0.0
          %v695 = vmax.f32 %v679, 0.0
          %v696 = vmax.f32 %v680, 0.0
          %v697 = vmax.f32 %v681, 0.0
          %v698 = vmax.f32 %v682, 0.0
          %v699 = vmax.f32 %v683, 0.0
          %v700 = vmax.f32 %v684, 0.0
          %v701 = vpack.c.bf16 %v685, %v685
          %v702 = vpack.c.bf16 %v686, %v686
          %v703 = vpack.c.bf16 %v687, %v687
          %v704 = vpack.c.bf16 %v688, %v688
          %v705 = vpack.c.bf16 %v689, %v689
          %v706 = vpack.c.bf16 %v690, %v690
          %v707 = vpack.c.bf16 %v691, %v691
          %v708 = vpack.c.bf16 %v692, %v692
          %v709 = vpack.c.bf16 %v693, %v693
          %v710 = vpack.c.bf16 %v694, %v694
          %v711 = vpack.c.bf16 %v695, %v695
          %v712 = vpack.c.bf16 %v696, %v696
          %v713 = vpack.c.bf16 %v697, %v697
          %v714 = vpack.c.bf16 %v698, %v698
          %v715 = vpack.c.bf16 %v699, %v699
          %v716 = vpack.c.bf16 %v700, %v700
          %717 = vst [vmem:[%s291] sm:$0xf] %v701
          %718 = vst [vmem:[%s291 + $0x4] sm:$0xf] %v702
          %719 = vst [vmem:[%s291 + $0x8] sm:$0xf] %v703
          %720 = vst [vmem:[%s291 + $0xc] sm:$0xf] %v704
          %721 = vst [vmem:[%s291 + $0x10] sm:$0xf] %v705
          %722 = vst [vmem:[%s291 + $0x14] sm:$0xf] %v706
          %723 = vst [vmem:[%s291 + $0x18] sm:$0xf] %v707
          %724 = vst [vmem:[%s291 + $0x1c] sm:$0xf] %v708
          %725 = vst [vmem:[%s291 + $0x20] sm:$0xf] %v709
          %726 = vst [vmem:[%s291 + $0x24] sm:$0xf] %v710
          %727 = vst [vmem:[%s291 + $0x28] sm:$0xf] %v711
          %728 = vst [vmem:[%s291 + $0x2c] sm:$0xf] %v712
          %729 = vst [vmem:[%s291 + $0x30] sm:$0xf] %v713
          %730 = vst [vmem:[%s291 + $0x34] sm:$0xf] %v714
          %731 = vst [vmem:[%s291 + $0x38] sm:$0xf] %v715
          %732 = vst [vmem:[%s291 + $0x3c] sm:$0xf] %v716
        $region56: #{tpu_custom_call.1} parent=35 // pred_fallthru
          _
        %s733 = sand.u32 %s140, 1
        %s734 = scalar_lea.sflag [#allocation5], %s733
        %s735 = sand.u32 %s140, 1
        %s736 = smul.addr %s735, 64
        %s737 = scalar_lea.vmem [#allocation9], %s736
        // Predicated region
        $region57: #{tpu_custom_call.1} parent=35 // pred_check
          %p738 = pneg %p150
        $region58: #{tpu_custom_call.1} parent=35 // pred_check_branch
          %740 = sbr.rel (%p738) target = $region60
        $region59: #{tpu_custom_call.1} parent=35 // pred_region
          %s741 = smul.u32 16, %s28
          %743 = vsyncadd %s734, 0
          %s744 = smul.addr %s741, 4
          %s745 = scalar_lea.hbm %s4, %s744
          %s746 = sshll.u32 %s737, 4
          %s747 = int_to_ptr.vmem [resolvable:$true] %s746
          %s748 = sshll.u32 %s745, 4
          %s749 = int_to_ptr.hbm [resolvable:$true] %s748
          %754 = dma.vmem_to_hbm [thread:$0]  %s747, 1024, %s749, %s734, 64, 64, 4
        $region60: #{tpu_custom_call.1} parent=35 // pred_fallthru
          _
      $region36: #{tpu_custom_call.1} parent=5 // pred_fallthru
        _
      %p755 = scmp.le.s32.totalorder 2, %s19
      // Predicated region
      $region61: #{tpu_custom_call.1} parent=5 // pred_check
        %p756 = pneg %p755
      $region62: #{tpu_custom_call.1} parent=5 // pred_check_branch
        %758 = sbr.rel (%p756) target = $region64
      $region63: #{tpu_custom_call.1} parent=5 // pred_region
        %s759 = ssub.s32 %s19, 2
        // Predicated region
        $region65: #{tpu_custom_call.1} parent=63 // pred_check
          %p760 = pneg %p156
        $region66: #{tpu_custom_call.1} parent=63 // pred_check_branch
          %762 = sbr.rel (%p760) target = $region68
        $region67: #{tpu_custom_call.1} parent=63 // pred_region
          %s763 = sand.u32 %s141, 1
          %s764 = scalar_lea.sflag [#allocation5], %s763
          %s765 = sand.u32 %s141, 1
          %s766 = smul.addr %s765, 64
          %s767 = scalar_lea.vmem [#allocation9], %s766
          %769 = dma.done %s764, 1024
        $region68: #{tpu_custom_call.1} parent=63 // pred_fallthru
          _
      $region64: #{tpu_custom_call.1} parent=5 // pred_fallthru
        _
    $region6: #{tpu_custom_call.1} parent=1 // loop_footer
      %s23 = sadd.s32 1, %s19
    $region7: #{tpu_custom_call.1} parent=1 // loop_footer_branch
      %18 = sbr.rel target = $region3
    $region8: #{tpu_custom_call.1} parent=1 // loop_exit
      _
    %770 = vsyncpa [#allocation4], 1
    %s771 = scalar_lea.sflag [#allocation4], 1
    %772 = vsyncpa %s771, 1
    %773 = vsyncpa [#allocation7], 1
    %s774 = scalar_lea.sflag [#allocation7], 1
    %775 = vsyncpa %s774, 1
    %776 = vsyncpa [#allocation5], 1
    %s777 = scalar_lea.sflag [#allocation5], 1
    %778 = vsyncpa %s777, 1

</llo_original>
